<compile_context>
chip_gen: v5e
topology: v5e:2x2
jax: 0.10.0
libtpu: 0.0.40
codegen_flags: <defaults>
</compile_context>

<pallas_src>
import functools

import jax
import jax.numpy as jnp
from jax.experimental import pallas as pl
from jax.experimental.pallas import tpu as pltpu


_VMEM_LIMIT_BYTES = 32 * 1024 * 1024     # <= default scoped limit on v6e/v7x, safe on v5e
_TILE_BUDGET_BYTES = 24 * 1024 * 1024    # headroom under the 32 MiB scoped limit


def _round_up(x, m):
    return (x + m - 1) // m * m


def _pick_tile_n(n, c, itemsize):
    """Pick a lane-dense batch tile from a conservative per-column VMEM budget."""
    # Per batch column (lane) we conservatively account for:
    #   2 x (C, tn) wire tiles          (double-buffered input DMA)
    # + ~5 live (C, tn) f32 temporaries (exp(x-m), where(eq, ...), ...)
    # + 2 x (1, tn) int32 target rows   (double-buffered)
    # + ~12 (1, tn) f32 row temporaries (m, lse, x_t, probs, loss, ...)
    per_col = 2 * c * itemsize + 5 * 4 * c + 2 * 4 + 12 * 4
    tn = (_TILE_BUDGET_BYTES // per_col) // 128 * 128
    tn = max(128, min(tn, _round_up(n, 128)))
    return int(tn)


def _make_focal_kernel(gamma: float):
    gamma = float(gamma)

    def focal_kernel(x_ref, t_ref, alpha_ref, out_ref):
        x = x_ref[...].astype(jnp.float32)            # (C, TN) logits, batch on lanes
        t = t_ref[...]                                # (1, TN) int32 targets (C on pad cols)
        alpha = alpha_ref[...].astype(jnp.float32)    # (C, 1)

        # Stable log-softmax over the class (sublane) axis: no divide, no log(probs).
        m = jnp.max(x, axis=0, keepdims=True)                  # (1, TN)
        s = jnp.sum(jnp.exp(x - m), axis=0, keepdims=True)     # (1, TN)
        lse = m + jnp.log(s)                                   # (1, TN)

        # One-hot gather via a single bool compare; padded columns (t == C) never match,
        # so alpha_n == 0 there and their loss is exactly zero.
        cls = jax.lax.broadcasted_iota(jnp.int32, x.shape, 0)  # (C, TN)
        eq = cls == t                                          # (C, TN) bool

        x_t = jnp.sum(jnp.where(eq, x, 0.0), axis=0, keepdims=True)       # target logit
        alpha_n = jnp.sum(jnp.where(eq, alpha, 0.0), axis=0, keepdims=True)  # alpha[target]

        log_p = x_t - lse                                      # log softmax at target
        probs = jnp.exp(log_p)
        one_minus = 1.0 - probs

        # Small integer gamma -> pure VPU multiplies (no exp/log pair on the hot path).
        if gamma == 2.0:
            focal_w = one_minus * one_minus
        elif gamma == 1.0:
            focal_w = one_minus
        elif gamma == 0.0:
            focal_w = jnp.ones_like(one_minus)
        else:
            # Clamp: log_p can exceed 0 by an ulp, making one_minus tiny-negative.
            focal_w = jnp.power(jnp.maximum(one_minus, 0.0), gamma)

        loss = -alpha_n * focal_w * log_p                      # (1, TN); 0 on padded cols

        # Per-block partial sum written to an (8,128)-aligned tile (unmasked store);
        # the wrapper reduces the partials and applies size_average.
        partial = jnp.sum(loss)
        out_ref[...] = jnp.full((1, 8, 128), partial, jnp.float32)

    return focal_kernel


@functools.partial(jax.jit, static_argnames=("gamma", "size_average", "tile_n"))
def focal_loss(inputs, targets, alpha, gamma=2.0, size_average=True, tile_n=None):
    """inputs: (N, C) logits (f32 or bf16); targets: (N,) int; alpha: (C, 1) or (C,)."""
    N, C = inputs.shape

    if tile_n is None:
        tn = _pick_tile_n(N, C, inputs.dtype.itemsize)
    else:
        tn = max(128, _round_up(int(tile_n), 128))
        tn = min(tn, _round_up(N, 128))
    n_pad = _round_up(N, tn)
    grid_n = n_pad // tn

    # Keep the native dtype on the wire (bf16 stays bf16); upcast inside the kernel.
    x = inputs
    t = targets.astype(jnp.int32)
    if n_pad != N:
        x = jnp.pad(x, ((0, n_pad - N), (0, 0)))
        # Out-of-range class id on padded columns -> alpha[target] == 0 -> loss == 0.
        t = jnp.pad(t, (0, n_pad - N), constant_values=C)

    # Under jit the pad + transpose fuse into one copy feeding the kernel.
    # TODO(synk): if the logits producer can emit (C, N) directly, drop this transpose.
    x_lane = x.T                              # (C, n_pad): batch lane-major
    t_row = t.reshape(1, n_pad)               # (1, n_pad) lane-dense targets
    alpha_col = jnp.asarray(alpha, jnp.float32).reshape(C, 1)

    cost = pl.CostEstimate(
        flops=10 * N * C,
        transcendentals=N * C + 2 * N,
        bytes_accessed=N * C * x.dtype.itemsize + N * 4 + C * 4 + grid_n * 8 * 128 * 4,
    )

    partials = pl.pallas_call(
        _make_focal_kernel(float(gamma)),
        out_shape=jax.ShapeDtypeStruct((grid_n, 8, 128), jnp.float32),
        grid_spec=pltpu.PrefetchScalarGridSpec(
            num_scalar_prefetch=0,
            grid=(grid_n,),
            in_specs=[
                pl.BlockSpec((C, tn), lambda i: (0, i)),   # logits tile
                pl.BlockSpec((1, tn), lambda i: (0, i)),   # targets tile
                pl.BlockSpec((C, 1), lambda i: (0, 0)),    # alpha (tiny, resident)
            ],
            out_specs=pl.BlockSpec((1, 8, 128), lambda i: (i, 0, 0)),
        ),
        compiler_params=pltpu.CompilerParams(
            dimension_semantics=("parallel",),             # independent blocks -> megacore OK
            vmem_limit_bytes=_VMEM_LIMIT_BYTES,
        ),
        cost_estimate=cost,
    )(x_lane, t_row, alpha_col)

    total = jnp.sum(partials[:, 0, 0])
    if size_average:
        total = total / N                                  # divide by TRUE N
    return total


def focal_loss_ref(inputs, targets, alpha, gamma=2.0, size_average=True):
    """Pure-JAX reference mirroring the PyTorch module."""
    x = inputs.astype(jnp.float32)
    N, C = x.shape
    p = jax.nn.softmax(x, axis=1)
    mask = jax.nn.one_hot(targets, C, dtype=jnp.float32)
    probs = jnp.sum(p * mask, axis=1, keepdims=True)
    alpha_n = jnp.asarray(alpha, jnp.float32).reshape(-1)[targets].reshape(-1, 1)
    log_p = jnp.log(probs)
    batch_loss = -alpha_n * jnp.power(1.0 - probs, gamma) * log_p
    return jnp.mean(batch_loss) if size_average else jnp.sum(batch_loss)


if __name__ == "__main__":
    key = jax.random.PRNGKey(0)
    k1, k2, k3, k4, k5, k6 = jax.random.split(key, 6)

    # --- small case matching the module's intended shapes (N=8 logits over 4 classes)
    N, C = 8, 4
    x = jax.random.normal(k1, (N, C), dtype=jnp.float32)
    targets = jax.random.randint(k2, (N,), 0, C, dtype=jnp.int32)
    alpha = jnp.ones((C, 1), dtype=jnp.float32)   # matches __init__: alpha = ones(C, 1)

    loss = focal_loss(x, targets, alpha, gamma=2.0, size_average=True)
    loss = jax.block_until_ready(loss)
    ref = focal_loss_ref(x, targets, alpha, gamma=2.0, size_average=True)
    assert jnp.allclose(loss, ref, rtol=1e-5, atol=1e-6), (loss, ref)

    # --- multi-tile case: exercises the N-grid, out-of-range-target padding,
    #     per-block partial sums, and the generic-gamma (clamped pow) path.
    N2, C2 = 300, 10
    x2 = jax.random.normal(k3, (N2, C2), dtype=jnp.float32)
    t2 = jax.random.randint(k4, (N2,), 0, C2, dtype=jnp.int32)
    alpha2 = jnp.linspace(0.5, 1.5, C2, dtype=jnp.float32).reshape(C2, 1)

    loss2 = focal_loss(x2, t2, alpha2, gamma=1.5, size_average=False, tile_n=128)
    loss2 = jax.block_until_ready(loss2)
    ref2 = focal_loss_ref(x2, t2, alpha2, gamma=1.5, size_average=False)
    assert jnp.allclose(loss2, ref2, rtol=1e-5, atol=1e-5), (loss2, ref2)

    # --- bf16-on-the-wire case (kernel upcasts internally; reference sees same bf16 input)
    N3, C3 = 256, 4
    x3 = jax.random.normal(k5, (N3, C3), dtype=jnp.bfloat16)
    t3 = jax.random.randint(k6, (N3,), 0, C3, dtype=jnp.int32)
    alpha3 = jnp.ones((C3, 1), dtype=jnp.float32)

    loss3 = focal_loss(x3, t3, alpha3, gamma=2.0, size_average=True, tile_n=128)
    loss3 = jax.block_until_ready(loss3)
    ref3 = focal_loss_ref(x3, t3, alpha3, gamma=2.0, size_average=True)
    assert jnp.allclose(loss3, ref3, rtol=1e-4, atol=1e-5), (loss3, ref3)

    print("KERNEL_OK")
</pallas_src>

<mosaic_0001>
module attributes {stable_mosaic.version = 11 : i64} {
  func.func @focal_kernel(%arg0: i32, %arg1: memref<4x128xf32, #tpu.memory_space<vmem>>, %arg2: memref<1x128xi32, #tpu.memory_space<vmem>>, %arg3: memref<4x1xf32, #tpu.memory_space<vmem>>, %arg4: memref<1x8x128xf32, #tpu.memory_space<vmem>>) attributes {dimension_semantics = [#tpu.dimension_semantics<parallel>], iteration_bounds = array<i64: 1>, scalar_prefetch = 0 : i64, scratch_operands = 0 : i64, tpu.core_type = #tpu.core_type<tc>, window_params = [{transform_indices = @transform_0, window_bounds = array<i64: 4, 128>}, {transform_indices = @transform_1, window_bounds = array<i64: 1, 128>}, {pipeline_mode = #tpu.pipeline_mode<synchronous>, transform_indices = @transform_2, window_bounds = array<i64: 4, 1>}, {transform_indices = @transform_3, window_bounds = array<i64: 1, 8, 128>}]} {
    %c0 = arith.constant 0 : index
    %c0_0 = arith.constant 0 : index
    %0 = vector.load %arg1[%c0, %c0_0] : memref<4x128xf32, #tpu.memory_space<vmem>>, vector<4x128xf32>
    %c0_1 = arith.constant 0 : index
    %c0_2 = arith.constant 0 : index
    %1 = vector.load %arg2[%c0_1, %c0_2] : memref<1x128xi32, #tpu.memory_space<vmem>>, vector<1x128xi32>
    %c0_3 = arith.constant 0 : index
    %c0_4 = arith.constant 0 : index
    %2 = vector.load %arg3[%c0_3, %c0_4] : memref<4x1xf32, #tpu.memory_space<vmem>>, vector<4x1xf32>
    %cst = arith.constant dense<0xFF800000> : vector<128xf32>
    %3 = vector.multi_reduction <maximumf>, %0, %cst [0] : vector<4x128xf32> to vector<128xf32>
    %4 = vector.shape_cast %3 : vector<128xf32> to vector<1x128xf32>
    %5 = vector.broadcast %4 : vector<1x128xf32> to vector<4x128xf32>
    %6 = arith.subf %0, %5 : vector<4x128xf32>
    %7 = math.exp %6 : vector<4x128xf32>
    %cst_5 = arith.constant dense<0.000000e+00> : vector<128xf32>
    %8 = vector.multi_reduction <add>, %7, %cst_5 [0] : vector<4x128xf32> to vector<128xf32>
    %9 = vector.shape_cast %8 : vector<128xf32> to vector<1x128xf32>
    %10 = math.log %9 : vector<1x128xf32>
    %11 = arith.addf %4, %10 : vector<1x128xf32>
    %12 = tpu.iota {dimensions = array<i32: 0>} : vector<4x128xi32>
    %13 = vector.broadcast %1 : vector<1x128xi32> to vector<4x128xi32>
    %14 = arith.cmpi eq, %12, %13 : vector<4x128xi32>
    %cst_6 = arith.constant 0.000000e+00 : f32
    %15 = vector.broadcast %cst_6 : f32 to vector<4x128xf32>
    %16 = arith.select %14, %0, %15 : vector<4x128xi1>, vector<4x128xf32>
    %cst_7 = arith.constant dense<0.000000e+00> : vector<128xf32>
    %17 = vector.multi_reduction <add>, %16, %cst_7 [0] : vector<4x128xf32> to vector<128xf32>
    %18 = vector.shape_cast %17 : vector<128xf32> to vector<1x128xf32>
    %cst_8 = arith.constant 0.000000e+00 : f32
    %19 = vector.shape_cast %2 : vector<4x1xf32> to vector<4x1xf32>
    %20 = vector.broadcast %19 : vector<4x1xf32> to vector<4x128xf32>
    %21 = vector.broadcast %cst_8 : f32 to vector<4x128xf32>
    %22 = arith.select %14, %20, %21 : vector<4x128xi1>, vector<4x128xf32>
    %cst_9 = arith.constant dense<0.000000e+00> : vector<128xf32>
    %23 = vector.multi_reduction <add>, %22, %cst_9 [0] : vector<4x128xf32> to vector<128xf32>
    %24 = vector.shape_cast %23 : vector<128xf32> to vector<1x128xf32>
    %25 = arith.subf %18, %11 : vector<1x128xf32>
    %26 = math.exp %25 : vector<1x128xf32>
    %cst_10 = arith.constant 1.000000e+00 : f32
    %27 = vector.broadcast %cst_10 : f32 to vector<1x128xf32>
    %28 = arith.subf %27, %26 : vector<1x128xf32>
    %29 = arith.mulf %28, %28 : vector<1x128xf32>
    %cst_11 = arith.constant 0.000000e+00 : f32
    %30 = vector.broadcast %cst_11 : f32 to vector<1x128xf32>
    %31 = arith.subf %30, %24 : vector<1x128xf32>
    %32 = arith.mulf %31, %29 : vector<1x128xf32>
    %33 = arith.mulf %32, %25 : vector<1x128xf32>
    %34 = vector.shape_cast %33 : vector<1x128xf32> to vector<1x1x128xf32>
    %cst_12 = arith.constant dense<0.000000e+00> : vector<1xf32>
    %35 = vector.multi_reduction <add>, %34, %cst_12 [1, 2] : vector<1x1x128xf32> to vector<1xf32>
    %36 = vector.shape_cast %35 : vector<1xf32> to vector<1x1x1xf32>
    %37 = vector.extract %36[0, 0, 0] : f32 from vector<1x1x1xf32>
    %38 = vector.broadcast %37 : f32 to vector<1x8x128xf32>
    %c0_13 = arith.constant 0 : index
    %c0_14 = arith.constant 0 : index
    %c0_15 = arith.constant 0 : index
    %39 = vector.load %arg4[%c0_13, %c0_14, %c0_15] : memref<1x8x128xf32, #tpu.memory_space<vmem>>, vector<1x8x128xf32>
    tpu.vector_store %arg4[%c0_13, %c0_14, %c0_15], %38 {strides = array<i32>} : memref<1x8x128xf32, #tpu.memory_space<vmem>>, vector<1x8x128xf32>,
    return
  }
  func.func @transform_0(%arg0: i32) -> (i32, i32) {
    %c0_i32 = arith.constant 0 : i32
    %c0_i32_0 = arith.constant 0 : i32
    return %c0_i32, %arg0 : i32, i32
  }
  func.func @transform_1(%arg0: i32) -> (i32, i32) {
    %c0_i32 = arith.constant 0 : i32
    %c0_i32_0 = arith.constant 0 : i32
    return %c0_i32, %arg0 : i32, i32
  }
  func.func @transform_2(%arg0: i32) -> (i32, i32) {
    %c0_i32 = arith.constant 0 : i32
    %c0_i32_0 = arith.constant 0 : i32
    %c0_i32_1 = arith.constant 0 : i32
    return %c0_i32, %c0_i32_0 : i32, i32
  }
  func.func @transform_3(%arg0: i32) -> (i32, i32, i32) {
    %c0_i32 = arith.constant 0 : i32
    %c0_i32_0 = arith.constant 0 : i32
    %c0_i32_1 = arith.constant 0 : i32
    return %arg0, %c0_i32, %c0_i32_0 : i32, i32, i32
  }
}

</mosaic_0001>

<llo_original>
// kernel: focal_loss.1
$region0: #{focal_loss.1}
  #allocation0 [shape = 'u32[]', space=smem, size = 0x4, offset = 0x4, fixed_abs, tag = 'smem constant byte address 0x4 - core index']
  #allocation1 [shape = 'u32[72,128]{1,0:T(1,128)}', space=vmem, size = 0x9000, scoped, tag = 'internal scratch']
  %s0 = inlined_call_operand.vmem [shape: f32[4,128], index: 0, kind: input, shape index: {}]
  %s1 = inlined_call_operand.vmem [shape: s32[1,128], index: 1, kind: input, shape index: {}]
  %s2 = inlined_call_operand.vmem [shape: f32[4,1], index: 2, kind: input, shape index: {}]
  %s3 = inlined_call_operand.vmem [shape: f32[1,8,128], index: 3, kind: output, shape index: {}]
  %s4 = sld [smem:[#allocation0]]
  $region22: #{focal_loss.1} parent=0
    _
  %s6 = ssub.s32 1, %s4
  %s7 = scalar_select 0, %s6, %s4
  // Predicated region
  $region2: #{focal_loss.1} parent=0 // pred_check
    _
  $region3: #{focal_loss.1} parent=0 // pred_check_branch
    %9 = sbr.rel (0) target = $region5
  $region4: #{focal_loss.1} parent=0 // pred_region
    _
  $region5: #{focal_loss.1} parent=0 // pred_fallthru
    _
  // Predicated region
  $region6: #{focal_loss.1} parent=0 // pred_check
    _
  $region7: #{focal_loss.1} parent=0 // pred_check_branch
    %11 = sbr.rel (0) target = $region9
  $region8: #{focal_loss.1} parent=0 // pred_region
    _
  $region9: #{focal_loss.1} parent=0 // pred_fallthru
    _
  // Predicated region
  $region10: #{focal_loss.1} parent=0 // pred_check
    _
  $region11: #{focal_loss.1} parent=0 // pred_check_branch
    %13 = sbr.rel (0) target = $region13
  $region12: #{focal_loss.1} parent=0 // pred_region
    _
  $region13: #{focal_loss.1} parent=0 // pred_fallthru
    _
  %v14 = vld [vmem:[%s0] sm:$0xf]
  %v15 = vld [vmem:[%s1] sm:$0x1]
  %v16 = vld [vmem:[%s2] sm:$0xf]
  %vm17 = vcmask 1043456
  %v18 = vsel %vm17, %v14, -inf
  %v19 = vrot.slane %v18, 4
  %v20 = vmax.f32 %v18, %v19
  %v21 = vrot.slane %v20, 2
  %v22 = vmax.f32 %v20, %v21
  %v23 = vrot.slane %v22, 1
  %v24 = vmax.f32 %v22, %v23
  %v25 = vsub.f32 %v14, %v24
  %v26 = vmul.f32 %v25, 1.442695
  %v27 = vpow.pop %v26
  %v28 = vsel %vm17, %v27, 0.0
  %v29 = vrot.slane %v28, 4
  %v30 = vadd.f32 %v28, %v29
  %v31 = vrot.slane %v30, 2
  %v32 = vadd.f32 %v30, %v31
  %v33 = vrot.slane %v32, 1
  %v34 = vadd.f32 %v32, %v33
  %v35 = vlog2.pop %v34
  %v36 = vmul.f32 %v35, 0.6931472
  %v37 = vadd.f32 %v24, %v36
  %v38 = vlaneseq
  %v39 = vshrl.u32 %v38, 7
  %v40 = vperm.slane %v15, 0
  %vm41 = vcmp.eq.s32.totalorder %v39, %v40
  %v42 = vsel %vm41, %v14, 0.0
  %v43 = vsel %vm17, %v42, 0.0
  %v44 = vrot.slane %v43, 4
  %v45 = vadd.f32 %v43, %v44
  %v46 = vrot.slane %v45, 2
  %v47 = vadd.f32 %v45, %v46
  %v48 = vrot.slane %v47, 1
  %v49 = vadd.f32 %v47, %v48
  %51 = vset.pattern.permute.xlu0 0
  %52 = vperm.xlu0 %51, %v16
  %v53 = vpop.permute.xlu0 %52
  %v55 = vsel %vm41, %v53, 0.0
  %v56 = vsel %vm17, %v55, 0.0
  %v57 = vrot.slane %v56, 4
  %v58 = vadd.f32 %v56, %v57
  %v59 = vrot.slane %v58, 2
  %v60 = vadd.f32 %v58, %v59
  %v61 = vrot.slane %v60, 1
  %v62 = vadd.f32 %v60, %v61
  %v63 = vsub.f32 %v49, %v37
  %v64 = vmul.f32 %v63, 1.442695
  %v65 = vpow.pop %v64
  %v66 = vsub.f32 1.0, %v65
  %v67 = vmul.f32 %v66, %v66
  %v68 = vsub.f32 0.0, %v62
  %v69 = vmul.f32 %v68, %v67
  %v70 = vmul.f32 %v69, %v63
  %vm71 = vcmask 1040384
  %v72 = vsel %vm71, %v70, 0.0
  %73 = vadd.xlane.f32.xlu0 %v72
  %v74 = vpop.xlane.xlu0 %73
  %v75 = vrot.slane %v74, 4
  %v76 = vadd.f32 %v74, %v75
  %v77 = vrot.slane %v76, 2
  %v78 = vadd.f32 %v76, %v77
  %v79 = vrot.slane %v78, 1
  %v80 = vadd.f32 %v78, %v79
  %s81 = vtos %v80
  %v82 = vstv %s81
  %83 = vst [vmem:[%s3] sm:$0xff] %v82
  // Predicated region
  $region14: #{focal_loss.1} parent=0 // pred_check
    _
  $region15: #{focal_loss.1} parent=0 // pred_check_branch
    %85 = sbr.rel (0) target = $region17
  $region16: #{focal_loss.1} parent=0 // pred_region
    _
  $region17: #{focal_loss.1} parent=0 // pred_fallthru
    _
  // Predicated region
  $region18: #{focal_loss.1} parent=0 // pred_check
    _
  $region19: #{focal_loss.1} parent=0 // pred_check_branch
    %87 = sbr.rel (0) target = $region21
  $region20: #{focal_loss.1} parent=0 // pred_region
    _
  $region21: #{focal_loss.1} parent=0 // pred_fallthru
    _

</llo_original>
